<compile_context>
chip_gen: v5e
topology: v5e:2x2
jax: 0.10.0
libtpu: 0.0.40
codegen_flags: <defaults>
</compile_context>

<pallas_src>
import functools
import math

import jax
import jax.numpy as jnp
from jax.experimental import pallas as pl
from jax.experimental.pallas import tpu as pltpu


def _round_up(x, m):
    return ((x + m - 1) // m) * m


def _vmem_limit(estimate_bytes):
    # explicit scoped-VMEM budget: 2x tile estimate with a 16 MiB floor, capped.
    return int(min(128 * 1024 * 1024, max(2 * estimate_bytes, 16 * 1024 * 1024)))


# ---------------------------------------------------------------------------
# support kernel: S = X @ W  (thin matmul; W stays resident, grid over rows)
# ---------------------------------------------------------------------------
def _support_kernel(x_ref, w_ref, o_ref):
    o_ref[...] = jnp.dot(
        x_ref[...], w_ref[...], preferred_element_type=jnp.float32
    ).astype(o_ref.dtype)


def _support_matmul(x, w, *, tm):
    n, kdim = x.shape
    f = w.shape[1]
    est = (2 * tm * kdim * 2) + (kdim * f * 2) + (2 * tm * f * 2)
    return pl.pallas_call(
        _support_kernel,
        out_shape=jax.ShapeDtypeStruct((n, f), jnp.bfloat16),
        grid_spec=pltpu.PrefetchScalarGridSpec(
            num_scalar_prefetch=0,
            grid=(n // tm,),
            in_specs=[
                pl.BlockSpec((tm, kdim), lambda i: (i, 0)),
                pl.BlockSpec((kdim, f), lambda i: (0, 0)),
            ],
            out_specs=pl.BlockSpec((tm, f), lambda i: (i, 0)),
        ),
        compiler_params=pltpu.CompilerParams(
            dimension_semantics=("parallel",),
            vmem_limit_bytes=_vmem_limit(est),
        ),
    )(x, w)


# ---------------------------------------------------------------------------
# propagate kernel: out = epilogue(adj @ S + b)
#   grid = (row tiles, adj-column reduction tiles); acc resident across k.
# ---------------------------------------------------------------------------
def _propagate_kernel(adj_ref, s_ref, b_ref, o_ref, acc_ref, *, epilogue, valid_cols):
    k = pl.program_id(1)

    @pl.when(k == 0)
    def _():
        acc_ref[...] = jnp.zeros_like(acc_ref)

    acc_ref[...] += jnp.dot(
        adj_ref[...], s_ref[...], preferred_element_type=jnp.float32
    )

    @pl.when(k == pl.num_programs(1) - 1)
    def _():
        z = acc_ref[...] + b_ref[...]
        if epilogue == "relu":
            o_ref[...] = jnp.maximum(z, 0.0).astype(o_ref.dtype)
        else:  # masked log_softmax over the (lane-padded) class dim
            lane = jax.lax.broadcasted_iota(jnp.int32, z.shape, 1)
            mask = lane < valid_cols
            zm = jnp.where(mask, z, jnp.float32(-1e30))
            m = jnp.max(zm, axis=-1, keepdims=True)
            e = jnp.where(mask, jnp.exp(zm - m), 0.0)
            lse = jnp.log(jnp.sum(e, axis=-1, keepdims=True))
            o_ref[...] = (zm - m - lse).astype(o_ref.dtype)


def _propagate(adj, s, b, *, tm, tk, epilogue, valid_cols, out_dtype):
    n = adj.shape[0]
    f = s.shape[1]
    kernel = functools.partial(
        _propagate_kernel, epilogue=epilogue, valid_cols=valid_cols
    )
    out_isz = jnp.dtype(out_dtype).itemsize
    est = (2 * tm * tk * 2) + (2 * tk * f * 2) + (2 * tm * f * out_isz) \
        + (tm * f * 4) + (2 * f * 4)
    return pl.pallas_call(
        kernel,
        out_shape=jax.ShapeDtypeStruct((n, f), out_dtype),
        grid_spec=pltpu.PrefetchScalarGridSpec(
            num_scalar_prefetch=0,
            grid=(n // tm, n // tk),
            in_specs=[
                pl.BlockSpec((tm, tk), lambda i, k: (i, k)),   # adj tile
                pl.BlockSpec((tk, f), lambda i, k: (k, 0)),    # support rows
                pl.BlockSpec((1, f), lambda i, k: (0, 0)),     # bias (f32)
            ],
            out_specs=pl.BlockSpec((tm, f), lambda i, k: (i, 0)),
            scratch_shapes=[pltpu.VMEM((tm, f), jnp.float32)],
        ),
        compiler_params=pltpu.CompilerParams(
            dimension_semantics=("parallel", "arbitrary"),
            vmem_limit_bytes=_vmem_limit(est),
        ),
    )(adj, s, b)


# ---------------------------------------------------------------------------
# full GCN forward
# ---------------------------------------------------------------------------
def gcn_forward(x, adj, w1, b1, w2, b2, *, tm=128, tk=128):
    n, nfeat = x.shape
    nhid = w1.shape[1]
    nclass = w2.shape[1]

    n_p = _round_up(n, max(tm, tk))
    f_p = _round_up(nfeat, 128)
    h_p = _round_up(nhid, 128)
    c_p = _round_up(nclass, 128)

    def pad2(a, r, c):
        return jnp.pad(a, ((0, r - a.shape[0]), (0, c - a.shape[1])))

    # bf16 operands for the MXU; biases / accumulation / epilogues stay f32.
    x_p = pad2(x, n_p, f_p).astype(jnp.bfloat16)
    adj_p = pad2(adj, n_p, n_p).astype(jnp.bfloat16)
    w1_p = pad2(w1, f_p, h_p).astype(jnp.bfloat16)
    w2_p = pad2(w2, h_p, c_p).astype(jnp.bfloat16)
    b1_p = pad2(b1.reshape(1, -1).astype(jnp.float32), 1, h_p)
    b2_p = pad2(b2.reshape(1, -1).astype(jnp.float32), 1, c_p)

    # layer 1: h = relu(adj @ (x @ W1) + b1)
    s1 = _support_matmul(x_p, w1_p, tm=tm)
    h = _propagate(adj_p, s1, b1_p, tm=tm, tk=tk,
                   epilogue="relu", valid_cols=h_p, out_dtype=jnp.bfloat16)

    # dropout: identity in eval mode (training=False)

    # layer 2: log_softmax(adj @ (h @ W2) + b2, axis=-1)
    s2 = _support_matmul(h, w2_p, tm=tm)
    out_p = _propagate(adj_p, s2, b2_p, tm=tm, tk=tk,
                       epilogue="log_softmax", valid_cols=nclass,
                       out_dtype=jnp.float32)

    return out_p[:n, :nclass]


# ---------------------------------------------------------------------------
# params / reference
# ---------------------------------------------------------------------------
def init_gcn_params(key, nfeat, nhid, nclass):
    """GraphConvolution.reset_parameters: uniform(-stdv, stdv), stdv=1/sqrt(out)."""
    k1, k2, k3, k4 = jax.random.split(key, 4)
    stdv1 = 1.0 / math.sqrt(nhid)
    stdv2 = 1.0 / math.sqrt(nclass)
    w1 = jax.random.uniform(k1, (nfeat, nhid), jnp.float32, -stdv1, stdv1)
    b1 = jax.random.uniform(k2, (nhid,), jnp.float32, -stdv1, stdv1)
    w2 = jax.random.uniform(k3, (nhid, nclass), jnp.float32, -stdv2, stdv2)
    b2 = jax.random.uniform(k4, (nclass,), jnp.float32, -stdv2, stdv2)
    return w1, b1, w2, b2


def gcn_reference(x, adj, w1, b1, w2, b2):
    h = jnp.maximum(adj @ (x @ w1) + b1, 0.0)
    logits = adj @ (h @ w2) + b2
    return jax.nn.log_softmax(logits, axis=-1)


if __name__ == "__main__":
    # small but non-trivial shapes, deliberately NOT multiples of 128
    # so the padding / lane-masking paths are exercised.
    N, nfeat, nhid, nclass = 200, 96, 48, 7

    key = jax.random.PRNGKey(0)
    kx, kadj, kp = jax.random.split(key, 3)

    x = jax.random.normal(kx, (N, nfeat), jnp.float32)

    # symmetric, row-normalized adjacency with self-loops (typical GCN input)
    a = (jax.random.uniform(kadj, (N, N)) > 0.9).astype(jnp.float32)
    a = jnp.maximum(a, a.T) + jnp.eye(N, dtype=jnp.float32)
    adj = a / jnp.sum(a, axis=-1, keepdims=True)

    w1, b1, w2, b2 = init_gcn_params(kp, nfeat, nhid, nclass)

    out = gcn_forward(x, adj, w1, b1, w2, b2)
    out = jax.block_until_ready(out)

    assert out.shape == (N, nclass)

    # rows must be valid log-probabilities
    row_sums = jnp.sum(jnp.exp(out), axis=-1)
    assert jnp.allclose(row_sums, 1.0, atol=1e-3), row_sums

    # match the f32 reference (bf16 matmul operands -> loose tolerance)
    ref = gcn_reference(x, adj, w1, b1, w2, b2)
    max_err = float(jnp.max(jnp.abs(out - ref)))
    assert max_err < 5e-2, max_err

    print("KERNEL_OK")
</pallas_src>

<mosaic_0001>
module attributes {stable_mosaic.version = 11 : i64} {
  func.func @_support_kernel(%arg0: i32, %arg1: memref<128x128xbf16, #tpu.memory_space<vmem>>, %arg2: memref<128x128xbf16, #tpu.memory_space<vmem>>, %arg3: memref<128x128xbf16, #tpu.memory_space<vmem>>) attributes {dimension_semantics = [#tpu.dimension_semantics<parallel>], iteration_bounds = array<i64: 2>, scalar_prefetch = 0 : i64, scratch_operands = 0 : i64, tpu.core_type = #tpu.core_type<tc>, window_params = [{transform_indices = @transform_0, window_bounds = array<i64: 128, 128>}, {pipeline_mode = #tpu.pipeline_mode<synchronous>, transform_indices = @transform_1, window_bounds = array<i64: 128, 128>}, {transform_indices = @transform_2, window_bounds = array<i64: 128, 128>}]} {
    %c0 = arith.constant 0 : index
    %c0_0 = arith.constant 0 : index
    %0 = vector.load %arg1[%c0, %c0_0] : memref<128x128xbf16, #tpu.memory_space<vmem>>, vector<128x128xbf16>
    %c0_1 = arith.constant 0 : index
    %c0_2 = arith.constant 0 : index
    %1 = vector.load %arg2[%c0_1, %c0_2] : memref<128x128xbf16, #tpu.memory_space<vmem>>, vector<128x128xbf16>
    %cst = arith.constant dense<0.000000e+00> : vector<128x128xf32>
    %2 = tpu.matmul %0, %1, %cst {dimension_numbers = #tpu.dot_dimension_numbers<[1], [0], [0], [1], [0, 0, 1, 1], [], []>} : vector<128x128xbf16>, vector<128x128xbf16>, vector<128x128xf32> -> vector<128x128xf32>
    %3 = arith.truncf %2 : vector<128x128xf32> to vector<128x128xbf16>
    %c0_3 = arith.constant 0 : index
    %c0_4 = arith.constant 0 : index
    %4 = vector.load %arg3[%c0_3, %c0_4] : memref<128x128xbf16, #tpu.memory_space<vmem>>, vector<128x128xbf16>
    tpu.vector_store %arg3[%c0_3, %c0_4], %3 {strides = array<i32>} : memref<128x128xbf16, #tpu.memory_space<vmem>>, vector<128x128xbf16>,
    return
  }
  func.func @transform_0(%arg0: i32) -> (i32, i32) {
    %c0_i32 = arith.constant 0 : i32
    %c0_i32_0 = arith.constant 0 : i32
    return %arg0, %c0_i32 : i32, i32
  }
  func.func @transform_1(%arg0: i32) -> (i32, i32) {
    %c0_i32 = arith.constant 0 : i32
    %c0_i32_0 = arith.constant 0 : i32
    %c0_i32_1 = arith.constant 0 : i32
    return %c0_i32, %c0_i32_0 : i32, i32
  }
  func.func @transform_2(%arg0: i32) -> (i32, i32) {
    %c0_i32 = arith.constant 0 : i32
    %c0_i32_0 = arith.constant 0 : i32
    return %arg0, %c0_i32 : i32, i32
  }
}

</mosaic_0001>

<llo_original>
// kernel: tpu_custom_call.1
$region0: #{tpu_custom_call.1}
  #allocation0 [shape = 'u32[]', space=smem, size = 0x4, offset = 0x4, fixed_abs, tag = 'smem constant byte address 0x4 - core index']
  #allocation1 [shape = 'u32[72,128]{1,0:T(1,128)}', space=vmem, size = 0x9000, scoped, tag = 'internal scratch']
  %s0 = inlined_call_operand.hbm [shape: bf16[256,128], index: 0, kind: input, shape index: {}]
  %s1 = inlined_call_operand.hbm [shape: bf16[128,128], index: 1, kind: input, shape index: {}]
  %s2 = inlined_call_operand.hbm [shape: bf16[256,128], index: 2, kind: output, shape index: {}]
  %s3 = sld [smem:[#allocation0]]
  $region49: #{tpu_custom_call.1} parent=0
    _
  %s5 = ssub.s32 1, %s3
  %s6 = scalar_select 0, %s5, %s3
  $region1: #{tpu_custom_call.1} parent=0
    #allocation2 [shape = 'u8[65536]{0}', space=vmem, size = 0x10000, scoped, tag = 'input window, operand 0']
    #allocation3 [shape = 's32[2]{0}', space=sflag, size = 0x8, scoped, tag = 'scoped memory for tpu_custom_call.1']
    #allocation4 [shape = 's32[2]{0}', space=sflag, size = 0x8, scoped, tag = 'scoped memory for tpu_custom_call.1']
    #allocation5 [shape = 'u8[32768]{0}', space=vmem, size = 0x8000, scoped, tag = 'input window, operand 1, single buffered']
    #allocation6 [shape = 's32[1]{0}', space=sflag, size = 0x4, scoped, tag = 'scoped memory for tpu_custom_call.1']
    #allocation7 [shape = 'u8[65536]{0}', space=vmem, size = 0x10000, scoped, tag = 'output window, operand 0']
    %7 = vsyncpa [#allocation3], 0
    %s8 = scalar_lea.sflag [#allocation3], 1
    %9 = vsyncpa %s8, 0
    %10 = vsyncpa [#allocation6], 0
    %11 = vsyncpa [#allocation4], 0
    %s12 = scalar_lea.sflag [#allocation4], 1
    %13 = vsyncpa %s12, 0
    loop: start=0, step=1, limit=4
    $region2: #{tpu_custom_call.1} parent=1 // loop_pre_header
      _
    $region3: #{tpu_custom_call.1} parent=1 // loop_header
      %s15 = sphi 0, %s19
      %p16 = scmp.ge.s32.totalorder %s15, 4
      %s25 = sphi 0, %s27
      %s28 = sphi 0, %s25
      %s29 = sphi 0, %s28
      %s45 = sphi 0, %s29
      %s49 = sphi 0, %s49
      %s51 = sphi 0, %s49
      %s52 = sphi 0, %s51
      %s66 = sphi 0, %s52
      %s72 = sphi 0, %s74
      %s75 = sphi 0, %s72
      %s76 = sphi 0, %s75
      %s92 = sphi 0, %s76
    $region4: #{tpu_custom_call.1} parent=1 // loop_header_branch
      %18 = sbr.rel (%p16) target = $region8
    $region5: #{tpu_custom_call.1} parent=1 // loop_body
      %s20 = ssub.s32 %s15, 1
      %s21 = ssub.s32 %s15, 2
      %s22 = sadd.s32 %s15, 1
      %s23 = ssub.s32 %s15, %s22
      %p24 = scmp.eq.s32.totalorder %s23, 0
      %s26 = sadd.s32 %s25, 1
      %s27 = scalar_select %p24, %s25, %s26
      %p30 = pneg %p24
      %p31 = scmp.eq.s32.totalorder %s15, 1
      %p32 = por %p30, %p31
      %p33 = scmp.ne.s32.totalorder %s25, %s28
      %p34 = scmp.eq.s32.totalorder %s15, 0
      %p35 = por %p33, %p34
      %p36 = scmp.ne.s32.totalorder %s25, %s28
      %p37 = scmp.eq.s32.totalorder %s20, 1
      %p38 = por %p36, %p37
      %p39 = scmp.ne.s32.totalorder %s28, %s29
      %p40 = scmp.eq.s32.totalorder %s20, 0
      %p41 = por %p39, %p40
      %p42 = scmp.ne.s32.totalorder %s28, %s29
      %p43 = scmp.eq.s32.totalorder %s21, 1
      %p44 = por %p42, %p43
      %p46 = scmp.ne.s32.totalorder %s29, %s45
      %p47 = scmp.eq.s32.totalorder %s21, 0
      %p48 = por %p46, %p47
      %s50 = sadd.s32 %s49, 1
      %p53 = scmp.eq.s32.totalorder %s15, 1
      %p54 = scmp.ne.s32.totalorder %s49, %s51
      %p55 = scmp.eq.s32.totalorder %s15, 0
      %p56 = por %p54, %p55
      %p57 = scmp.ne.s32.totalorder %s49, %s51
      %p58 = scmp.eq.s32.totalorder %s20, 1
      %p59 = por %p57, %p58
      %p60 = scmp.ne.s32.totalorder %s51, %s52
      %p61 = scmp.eq.s32.totalorder %s20, 0
      %p62 = por %p60, %p61
      %p63 = scmp.ne.s32.totalorder %s51, %s52
      %p64 = scmp.eq.s32.totalorder %s21, 1
      %p65 = por %p63, %p64
      %p67 = scmp.ne.s32.totalorder %s52, %s66
      %p68 = scmp.eq.s32.totalorder %s21, 0
      %p69 = por %p67, %p68
      %s70 = ssub.s32 %s15, %s22
      %p71 = scmp.eq.s32.totalorder %s70, 0
      %s73 = sadd.s32 %s72, 1
      %s74 = scalar_select %p71, %s72, %s73
      %p77 = pneg %p71
      %p78 = scmp.eq.s32.totalorder %s15, 1
      %p79 = por %p77, %p78
      %p80 = scmp.ne.s32.totalorder %s72, %s75
      %p81 = scmp.eq.s32.totalorder %s15, 0
      %p82 = por %p80, %p81
      %p83 = scmp.ne.s32.totalorder %s72, %s75
      %p84 = scmp.eq.s32.totalorder %s20, 1
      %p85 = por %p83, %p84
      %p86 = scmp.ne.s32.totalorder %s75, %s76
      %p87 = scmp.eq.s32.totalorder %s20, 0
      %p88 = por %p86, %p87
      %p89 = scmp.ne.s32.totalorder %s75, %s76
      %p90 = scmp.eq.s32.totalorder %s21, 1
      %p91 = por %p89, %p90
      %p93 = scmp.ne.s32.totalorder %s76, %s92
      %p94 = scmp.eq.s32.totalorder %s21, 0
      %p95 = por %p93, %p94
      %p96 = scmp.le.s32.totalorder 1, %s15
      %p97 = scmp.lt.s32.totalorder %s15, 3
      %p98 = pnand %p96, %p97
      %p99 = pneg %p98
      // Predicated region
      $region9: #{tpu_custom_call.1} parent=5 // pred_check
        _
      $region10: #{tpu_custom_call.1} parent=5 // pred_check_branch
        %101 = sbr.rel (%p98) target = $region12
      $region11: #{tpu_custom_call.1} parent=5 // pred_region
        %s102 = ssub.s32 %s15, 1
        // Predicated region
        $region13: #{tpu_custom_call.1} parent=11 // pred_check
          %p103 = pneg %p62
        $region14: #{tpu_custom_call.1} parent=11 // pred_check_branch
          %105 = sbr.rel (%p103) target = $region16
        $region15: #{tpu_custom_call.1} parent=11 // pred_region
          %107 = vsyncadd [#allocation6], 0
          %s108 = sshll.u32 %s1, 4
          %s109 = int_to_ptr.hbm [resolvable:$true] %s108
          %s110 = sshll.u32 [#allocation5], 4
          %s111 = int_to_ptr.vmem [resolvable:$true] %s110
          %116 = dma.hbm_to_vmem [thread:$0]  %s109, 1024, %s111, [#allocation6], 64, 64, 4
        $region16: #{tpu_custom_call.1} parent=11 // pred_fallthru
          _
      $region12: #{tpu_custom_call.1} parent=5 // pred_fallthru
        _
      %p117 = scmp.lt.s32.totalorder %s15, 2
      // Predicated region
      $region17: #{tpu_custom_call.1} parent=5 // pred_check
        %p118 = pneg %p117
      $region18: #{tpu_custom_call.1} parent=5 // pred_check_branch
        %120 = sbr.rel (%p118) target = $region20
      $region19: #{tpu_custom_call.1} parent=5 // pred_region
        // Predicated region
        $region21: #{tpu_custom_call.1} parent=19 // pred_check
          %p121 = pneg %p35
        $region22: #{tpu_custom_call.1} parent=19 // pred_check_branch
          %123 = sbr.rel (%p121) target = $region24
        $region23: #{tpu_custom_call.1} parent=19 // pred_region
          %s124 = sand.u32 %s25, 1
          %s125 = scalar_lea.sflag [#allocation3], %s124
          %s126 = sand.u32 %s25, 1
          %s127 = smul.addr %s126, 64
          %s128 = scalar_lea.vmem [#allocation2], %s127
          %s129 = smul.u32 16, %s15
          %131 = vsyncadd %s125, 0
          %s132 = smul.addr %s129, 4
          %s133 = scalar_lea.hbm %s0, %s132
          %s134 = sshll.u32 %s133, 4
          %s135 = int_to_ptr.hbm [resolvable:$true] %s134
          %s136 = sshll.u32 %s128, 4
          %s137 = int_to_ptr.vmem [resolvable:$true] %s136
          %142 = dma.hbm_to_vmem [thread:$0]  %s135, 1024, %s137, %s125, 64, 64, 4
        $region24: #{tpu_custom_call.1} parent=19 // pred_fallthru
          _
      $region20: #{tpu_custom_call.1} parent=5 // pred_fallthru
        _
      %p143 = scmp.le.s32.totalorder 1, %s15
      %p144 = scmp.lt.s32.totalorder %s15, 3
      %p145 = pnand %p143, %p144
      %p146 = pneg %p145
      // Predicated region
      $region25: #{tpu_custom_call.1} parent=5 // pred_check
        _
      $region26: #{tpu_custom_call.1} parent=5 // pred_check_branch
        %148 = sbr.rel (%p145) target = $region28
      $region27: #{tpu_custom_call.1} parent=5 // pred_region
        %s149 = ssub.s32 %s15, 1
        %s150 = sand.u32 %s28, 1
        %s151 = scalar_lea.sflag [#allocation3], %s150
        %s152 = sand.u32 %s28, 1
        %s153 = smul.addr %s152, 64
        %s154 = scalar_lea.vmem [#allocation2], %s153
        // Predicated region
        $region29: #{tpu_custom_call.1} parent=27 // pred_check
          %p155 = pneg %p41
        $region30: #{tpu_custom_call.1} parent=27 // pred_check_branch
          %157 = sbr.rel (%p155) target = $region32
        $region31: #{tpu_custom_call.1} parent=27 // pred_region
          %159 = dma.done %s151, 1024
        $region32: #{tpu_custom_call.1} parent=27 // pred_fallthru
          _
        // Predicated region
        $region33: #{tpu_custom_call.1} parent=27 // pred_check
          %p160 = pneg %p62
        $region34: #{tpu_custom_call.1} parent=27 // pred_check_branch
          %162 = sbr.rel (%p160) target = $region36
        $region35: #{tpu_custom_call.1} parent=27 // pred_region
          %164 = dma.done [#allocation6], 1024
        $region36: #{tpu_custom_call.1} parent=27 // pred_fallthru
          _
        %s165 = sand.u32 %s28, 1
        %s166 = scalar_lea.sflag [#allocation3], %s165
        %s167 = sand.u32 %s28, 1
        %s168 = smul.addr %s167, 64
        %s169 = scalar_lea.vmem [#allocation2], %s168
        %p170 = pneg %p41
        %p171 = pneg %p38
        %p172 = pneg %p62
        %p173 = pneg %p59
        %p174 = pneg %p88
        %p175 = pneg %p85
        %s176 = sand.u32 %s75, 1
        %s177 = scalar_lea.sflag [#allocation4], %s176
        %s178 = sand.u32 %s75, 1
        %s179 = smul.addr %s178, 64
        %s180 = scalar_lea.vmem [#allocation7], %s179
        %s181 = smul.u32 16, %s20
        %s182 = smul.u32 16, %s20
        %v183 = vld [vmem:[%s154] sm:$0xf]
        %v184 = vld [vmem:[%s154 + $0x4] sm:$0xf]
        %v185 = vld [vmem:[%s154 + $0x8] sm:$0xf]
        %v186 = vld [vmem:[%s154 + $0xc] sm:$0xf]
        %v187 = vld [vmem:[%s154 + $0x10] sm:$0xf]
        %v188 = vld [vmem:[%s154 + $0x14] sm:$0xf]
        %v189 = vld [vmem:[%s154 + $0x18] sm:$0xf]
        %v190 = vld [vmem:[%s154 + $0x1c] sm:$0xf]
        %v191 = vld [vmem:[%s154 + $0x20] sm:$0xf]
        %v192 = vld [vmem:[%s154 + $0x24] sm:$0xf]
        %v193 = vld [vmem:[%s154 + $0x28] sm:$0xf]
        %v194 = vld [vmem:[%s154 + $0x2c] sm:$0xf]
        %v195 = vld [vmem:[%s154 + $0x30] sm:$0xf]
        %v196 = vld [vmem:[%s154 + $0x34] sm:$0xf]
        %v197 = vld [vmem:[%s154 + $0x38] sm:$0xf]
        %v198 = vld [vmem:[%s154 + $0x3c] sm:$0xf]
        %v199 = vld [vmem:[#allocation5] sm:$0xf]
        %v200 = vld [vmem:[#allocation5 + $0x4] sm:$0xf]
        %v201 = vld [vmem:[#allocation5 + $0x8] sm:$0xf]
        %v202 = vld [vmem:[#allocation5 + $0xc] sm:$0xf]
        %v203 = vld [vmem:[#allocation5 + $0x10] sm:$0xf]
        %v204 = vld [vmem:[#allocation5 + $0x14] sm:$0xf]
        %v205 = vld [vmem:[#allocation5 + $0x18] sm:$0xf]
        %v206 = vld [vmem:[#allocation5 + $0x1c] sm:$0xf]
        %v207 = vld [vmem:[#allocation5 + $0x20] sm:$0xf]
        %v208 = vld [vmem:[#allocation5 + $0x24] sm:$0xf]
        %v209 = vld [vmem:[#allocation5 + $0x28] sm:$0xf]
        %v210 = vld [vmem:[#allocation5 + $0x2c] sm:$0xf]
        %v211 = vld [vmem:[#allocation5 + $0x30] sm:$0xf]
        %v212 = vld [vmem:[#allocation5 + $0x34] sm:$0xf]
        %v213 = vld [vmem:[#allocation5 + $0x38] sm:$0xf]
        %v214 = vld [vmem:[#allocation5 + $0x3c] sm:$0xf]
        %v231 = vunpack.c.l.b16 %v183
        %v232 = vunpack.c.l.b16 %v184
        %v233 = vunpack.c.l.b16 %v185
        %v234 = vunpack.c.l.b16 %v186
        %v235 = vunpack.c.l.b16 %v187
        %v236 = vunpack.c.l.b16 %v188
        %v237 = vunpack.c.l.b16 %v189
        %v238 = vunpack.c.l.b16 %v190
        %v239 = vunpack.c.l.b16 %v191
        %v240 = vunpack.c.l.b16 %v192
        %v241 = vunpack.c.l.b16 %v193
        %v242 = vunpack.c.l.b16 %v194
        %v243 = vunpack.c.l.b16 %v195
        %v244 = vunpack.c.l.b16 %v196
        %v245 = vunpack.c.l.b16 %v197
        %v246 = vunpack.c.l.b16 %v198
        %v247 = vpack.c.b16 %v232, %v231
        %v248 = vpack.c.b16 %v234, %v233
        %v249 = vpack.c.b16 %v236, %v235
        %v250 = vpack.c.b16 %v238, %v237
        %v251 = vpack.c.b16 %v240, %v239
        %v252 = vpack.c.b16 %v242, %v241
        %v253 = vpack.c.b16 %v244, %v243
        %v254 = vpack.c.b16 %v246, %v245
        %v279 = vunpack.c.l.b16 %v199
        %v280 = vunpack.c.l.b16 %v200
        %v281 = vunpack.c.l.b16 %v201
        %v282 = vunpack.c.l.b16 %v202
        %v283 = vunpack.c.l.b16 %v203
        %v284 = vunpack.c.l.b16 %v204
        %v285 = vunpack.c.l.b16 %v205
        %v286 = vunpack.c.l.b16 %v206
        %v287 = vunpack.c.l.b16 %v207
        %v288 = vunpack.c.l.b16 %v208
        %v289 = vunpack.c.l.b16 %v209
        %v290 = vunpack.c.l.b16 %v210
        %v291 = vunpack.c.l.b16 %v211
        %v292 = vunpack.c.l.b16 %v212
        %v293 = vunpack.c.l.b16 %v213
        %v294 = vunpack.c.l.b16 %v214
        %v295 = vpack.c.b16 %v280, %v279
        %v296 = vpack.c.b16 %v282, %v281
        %v297 = vpack.c.b16 %v284, %v283
        %v298 = vpack.c.b16 %v286, %v285
        %v299 = vpack.c.b16 %v288, %v287
        %v300 = vpack.c.b16 %v290, %v289
        %v301 = vpack.c.b16 %v292, %v291
        %v302 = vpack.c.b16 %v294, %v293
        %311 = vmatpush.bf16.msra.mxu0 %v302
        %312 = vmatpush.bf16.msra.mxu0 %v301
        %313 = vmatpush.bf16.msra.mxu0 %v300
        %314 = vmatpush.bf16.msra.mxu0 %v299
        %315 = vmatpush.bf16.msra.mxu0 %v298
        %316 = vmatpush.bf16.msra.mxu0 %v297
        %317 = vmatpush.bf16.msra.mxu0 %v296
        %318 = vmatpush.bf16.msra.mxu0 %v295
        %319 = vmatmul.bf16.gmra.mxu0 %v247
        %v320 = vpop.f32.mrf.mxu0
        %v321 = vadd.f32 0.0, %v320
        %v322 = vpop.f32.mrf.mxu0
        %v323 = vadd.f32 0.0, %v322
        %324 = vmatmul.bf16.gmra.mxu0 %v248
        %v325 = vpop.f32.mrf.mxu0
        %v326 = vadd.f32 0.0, %v325
        %v327 = vpop.f32.mrf.mxu0
        %v328 = vadd.f32 0.0, %v327
        %329 = vmatmul.bf16.gmra.mxu0 %v249
        %v330 = vpop.f32.mrf.mxu0
        %v331 = vadd.f32 0.0, %v330
        %v332 = vpop.f32.mrf.mxu0
        %v333 = vadd.f32 0.0, %v332
        %334 = vmatmul.bf16.gmra.mxu0 %v250
        %v335 = vpop.f32.mrf.mxu0
        %v336 = vadd.f32 0.0, %v335
        %v337 = vpop.f32.mrf.mxu0
        %v338 = vadd.f32 0.0, %v337
        %339 = vmatmul.bf16.gmra.mxu0 %v251
        %v340 = vpop.f32.mrf.mxu0
        %v341 = vadd.f32 0.0, %v340
        %v342 = vpop.f32.mrf.mxu0
        %v343 = vadd.f32 0.0, %v342
        %344 = vmatmul.bf16.gmra.mxu0 %v252
        %v345 = vpop.f32.mrf.mxu0
        %v346 = vadd.f32 0.0, %v345
        %v347 = vpop.f32.mrf.mxu0
        %v348 = vadd.f32 0.0, %v347
        %349 = vmatmul.bf16.gmra.mxu0 %v253
        %v350 = vpop.f32.mrf.mxu0
        %v351 = vadd.f32 0.0, %v350
        %v352 = vpop.f32.mrf.mxu0
        %v353 = vadd.f32 0.0, %v352
        %354 = vmatmul.bf16.gmra.mxu0 %v254
        %v355 = vpop.f32.mrf.mxu0
        %v356 = vadd.f32 0.0, %v355
        %v357 = vpop.f32.mrf.mxu0
        %v358 = vadd.f32 0.0, %v357
        %359 = vdwg.mxu0
        %v360 = vpack.c.bf16 %v321, %v321
        %v361 = vpack.c.bf16 %v323, %v323
        %v362 = vpack.c.bf16 %v326, %v326
        %v363 = vpack.c.bf16 %v328, %v328
        %v364 = vpack.c.bf16 %v331, %v331
        %v365 = vpack.c.bf16 %v333, %v333
        %v366 = vpack.c.bf16 %v336, %v336
        %v367 = vpack.c.bf16 %v338, %v338
        %v368 = vpack.c.bf16 %v341, %v341
        %v369 = vpack.c.bf16 %v343, %v343
        %v370 = vpack.c.bf16 %v346, %v346
        %v371 = vpack.c.bf16 %v348, %v348
        %v372 = vpack.c.bf16 %v351, %v351
        %v373 = vpack.c.bf16 %v353, %v353
        %v374 = vpack.c.bf16 %v356, %v356
        %v375 = vpack.c.bf16 %v358, %v358
        %376 = vst [vmem:[%s180] sm:$0xf] %v360
        %377 = vst [vmem:[%s180 + $0x4] sm:$0xf] %v361
        %378 = vst [vmem:[%s180 + $0x8] sm:$0xf] %v362
        %379 = vst [vmem:[%s180 + $0xc] sm:$0xf] %v363
        %380 = vst [vmem:[%s180 + $0x10] sm:$0xf] %v364
        %381 = vst [vmem:[%s180 + $0x14] sm:$0xf] %v365
        %382 = vst [vmem:[%s180 + $0x18] sm:$0xf] %v366
        %383 = vst [vmem:[%s180 + $0x1c] sm:$0xf] %v367
        %384 = vst [vmem:[%s180 + $0x20] sm:$0xf] %v368
        %385 = vst [vmem:[%s180 + $0x24] sm:$0xf] %v369
        %386 = vst [vmem:[%s180 + $0x28] sm:$0xf] %v370
        %387 = vst [vmem:[%s180 + $0x2c] sm:$0xf] %v371
        %388 = vst [vmem:[%s180 + $0x30] sm:$0xf] %v372
        %389 = vst [vmem:[%s180 + $0x34] sm:$0xf] %v373
        %390 = vst [vmem:[%s180 + $0x38] sm:$0xf] %v374
        %391 = vst [vmem:[%s180 + $0x3c] sm:$0xf] %v375
        %s392 = sand.u32 %s75, 1
        %s393 = scalar_lea.sflag [#allocation4], %s392
        %s394 = sand.u32 %s75, 1
        %s395 = smul.addr %s394, 64
        %s396 = scalar_lea.vmem [#allocation7], %s395
        // Predicated region
        $region37: #{tpu_custom_call.1} parent=27 // pred_check
          %p397 = pneg %p85
        $region38: #{tpu_custom_call.1} parent=27 // pred_check_branch
          %399 = sbr.rel (%p397) target = $region40
        $region39: #{tpu_custom_call.1} parent=27 // pred_region
          %s400 = smul.u32 16, %s20
          %402 = vsyncadd %s393, 0
          %s403 = smul.addr %s400, 4
          %s404 = scalar_lea.hbm %s2, %s403
          %s405 = sshll.u32 %s396, 4
          %s406 = int_to_ptr.vmem [resolvable:$true] %s405
          %s407 = sshll.u32 %s404, 4
          %s408 = int_to_ptr.hbm [resolvable:$true] %s407
          %413 = dma.vmem_to_hbm [thread:$0]  %s406, 1024, %s408, %s393, 64, 64, 4
        $region40: #{tpu_custom_call.1} parent=27 // pred_fallthru
          _
      $region28: #{tpu_custom_call.1} parent=5 // pred_fallthru
        _
      %p414 = scmp.le.s32.totalorder 2, %s15
      // Predicated region
      $region41: #{tpu_custom_call.1} parent=5 // pred_check
        %p415 = pneg %p414
      $region42: #{tpu_custom_call.1} parent=5 // pred_check_branch
        %417 = sbr.rel (%p415) target = $region44
      $region43: #{tpu_custom_call.1} parent=5 // pred_region
        %s418 = ssub.s32 %s15, 2
        // Predicated region
        $region45: #{tpu_custom_call.1} parent=43 // pred_check
          %p419 = pneg %p91
        $region46: #{tpu_custom_call.1} parent=43 // pred_check_branch
          %421 = sbr.rel (%p419) target = $region48
        $region47: #{tpu_custom_call.1} parent=43 // pred_region
          %s422 = sand.u32 %s76, 1
          %s423 = scalar_lea.sflag [#allocation4], %s422
          %s424 = sand.u32 %s76, 1
          %s425 = smul.addr %s424, 64
          %s426 = scalar_lea.vmem [#allocation7], %s425
          %428 = dma.done %s423, 1024
        $region48: #{tpu_custom_call.1} parent=43 // pred_fallthru
          _
      $region44: #{tpu_custom_call.1} parent=5 // pred_fallthru
        _
    $region6: #{tpu_custom_call.1} parent=1 // loop_footer
      %s19 = sadd.s32 1, %s15
    $region7: #{tpu_custom_call.1} parent=1 // loop_footer_branch
      %14 = sbr.rel target = $region3
    $region8: #{tpu_custom_call.1} parent=1 // loop_exit
      _
    %429 = vsyncpa [#allocation3], 1
    %s430 = scalar_lea.sflag [#allocation3], 1
    %431 = vsyncpa %s430, 1
    %432 = vsyncpa [#allocation6], 1
    %433 = vsyncpa [#allocation4], 1
    %s434 = scalar_lea.sflag [#allocation4], 1
    %435 = vsyncpa %s434, 1

</llo_original>
